<compile_context>
chip_gen: v6e
topology: v6e:2x2x1
jax: 0.10.0
libtpu: 0.0.40
codegen_flags: <defaults>
</compile_context>

<pallas_src>
import jax
import jax.numpy as jnp
from jax.experimental import pallas as pl
from jax.experimental.pallas import tpu as pltpu

_LANE = 128


def _round_up(x, m):
    return ((x + m - 1) // m) * m


def _cdiv(a, b):
    return (a + b - 1) // b


_ACTIVATIONS = {
    None: lambda v: v,
    "Identity": lambda v: v,
    "Tanh": jnp.tanh,
    "ReLU": lambda v: jnp.maximum(v, 0.0),
    "Sigmoid": jax.nn.sigmoid,
    "LeakyReLU": lambda v: jnp.where(v >= 0, v, 0.01 * v),
}


def _vmem_budget_bytes():
    """Per-generation VMEM budget: physical capacity minus compiler headroom."""
    vmem = None
    try:
        vmem = getattr(pltpu.get_tpu_info(), "vmem_capacity_bytes", None)
    except Exception:
        vmem = None
    if not vmem:
        kind = ""
        try:
            kind = jax.devices()[0].device_kind.lower()
        except Exception:
            pass
        if any(t in kind for t in ("v5 lite", "v5e", "v5p", "v6")):
            vmem = 128 << 20          # v5e / v5p / v6e: 128 MiB physical
        else:
            vmem = 64 << 20           # v7x (64 MiB / TC) and unknown: conservative
    return max(16 << 20, int(vmem) - (20 << 20))


def _even_batch_grid(B, bt, sublane):
    """If the batch grid is short and odd, nudge it even (v7x megacore balance)."""
    grid_b = _cdiv(B, bt)
    if grid_b >= 3 and grid_b % 2 == 1:
        bt2 = max(sublane, _round_up(_cdiv(B, grid_b + 1), sublane))
        if _cdiv(B, bt2) % 2 == 0:
            return bt2, _cdiv(B, bt2)
    return bt, grid_b


def _make_linear_kernel(act_fn, has_bias, cast_x_to, precision):
    """Fused Linear(+bias)+activation over one (bt, tn) output block."""

    def compute(x_ref, w_ref, b_ref):
        xv = x_ref[...]
        if cast_x_to is not None:
            xv = xv.astype(cast_x_to)          # operand cast done on-chip
        acc = jnp.dot(xv, w_ref[...],
                      preferred_element_type=jnp.float32, precision=precision)
        if has_bias:
            acc = acc + b_ref[...].astype(jnp.float32)
        return act_fn(acc)

    if has_bias:
        def kernel(x_ref, w_ref, b_ref, o_ref):
            o_ref[...] = compute(x_ref, w_ref, b_ref).astype(o_ref.dtype)
    else:
        def kernel(x_ref, w_ref, o_ref):
            o_ref[...] = compute(x_ref, w_ref, None).astype(o_ref.dtype)
    return kernel


def _make_concat_kernel(act_fn, has_bias, cast_x_to, precision):
    """Fused Linear(+bias)+activation+concat: writes [x | act(x@w+b)]."""

    def compute(x_ref, w_ref, b_ref, o_ref):
        xv = x_ref[...]
        a = xv.astype(cast_x_to) if cast_x_to is not None else xv
        acc = jnp.dot(a, w_ref[...],
                      preferred_element_type=jnp.float32, precision=precision)
        if has_bias:
            acc = acc + b_ref[...].astype(jnp.float32)
        y = act_fn(acc).astype(o_ref.dtype)
        o_ref[...] = jnp.concatenate([xv.astype(o_ref.dtype), y], axis=1)

    if has_bias:
        def kernel(x_ref, w_ref, b_ref, o_ref):
            compute(x_ref, w_ref, b_ref, o_ref)
    else:
        def kernel(x_ref, w_ref, o_ref):
            compute(x_ref, w_ref, None, o_ref)
    return kernel


def linear_block_forward(
    x,
    w,
    b=None,
    *,
    activation="Tanh",
    skip_connection=None,
    batch_tile=4096,
    out_tile=512,
    compute_dtype=None,
    vmem_budget_bytes=None,
    trim_output=True,
    precision=None,
):
    """LinearBlock.forward.

    x: (B, in_channels); w: (in_channels, out_channels) [== torch weight.T];
    b: optional (out_channels,).
    Returns (B, out_channels), or (B, in+out) when skip_connection == 'concat'.
    Pass precision=jax.lax.Precision.HIGHEST for bit-level f32 matmul parity.
    """
    B, F = x.shape
    Fw, O = w.shape
    assert Fw == F, "weight must be stored as (in_channels, out_channels)"
    out_dtype = x.dtype
    act_fn = _ACTIVATIONS[activation]
    has_bias = b is not None
    concat = (skip_connection == "concat")

    budget = vmem_budget_bytes if vmem_budget_bytes is not None else _vmem_budget_bytes()

    # Operand dtypes: weights cast once in the wrapper (tiny, grid-invariant);
    # x stays in its stored dtype and is cast inside the kernel if needed;
    # bias always stays f32 (avoid double rounding).
    w_dt = jnp.dtype(compute_dtype) if compute_dtype is not None else jnp.dtype(w.dtype)
    w_op = w.astype(w_dt) if w.dtype != w_dt else w
    cast_x_to = w_dt if (compute_dtype is not None and jnp.dtype(x.dtype) != w_dt) else None

    x_isz = jnp.dtype(x.dtype).itemsize
    w_isz = w_dt.itemsize
    out_isz = jnp.dtype(out_dtype).itemsize
    sublane = 16 if jnp.dtype(x.dtype) == jnp.dtype(jnp.bfloat16) else 8
    trans = 1 if activation in ("Tanh", "Sigmoid") else 0

    # ----------------------------------------------------------------------
    # skip_connection == 'concat': fused in-kernel concat, 1-D batch grid.
    # ----------------------------------------------------------------------
    if concat:
        cols = F + O
        bt = _round_up(min(batch_tile, max(B, 1)), sublane)
        w_bytes = F * O * w_isz + (O * 4 if has_bias else 0)

        def est(t_b):
            return 2 * t_b * F * x_isz + 2 * t_b * cols * out_isz + w_bytes

        while bt > sublane and est(bt) > budget:
            bt = max(sublane, _round_up(bt // 2, sublane))
        bt, grid_b = _even_batch_grid(B, bt, sublane)

        in_specs = [
            pl.BlockSpec((bt, F), lambda i: (i, 0)),
            pl.BlockSpec((F, O), lambda i: (0, 0), pipeline_mode=pl.Buffered(1)),
        ]
        inputs = [x, w_op]
        if has_bias:
            in_specs.append(
                pl.BlockSpec((1, O), lambda i: (0, 0), pipeline_mode=pl.Buffered(1)))
            inputs.append(b.reshape(1, O).astype(jnp.float32))

        est_bytes = est(bt)
        vmem_limit = int(max(est_bytes + (4 << 20),
                             min(budget, est_bytes + (16 << 20))))

        out = pl.pallas_call(
            _make_concat_kernel(act_fn, has_bias, cast_x_to, precision),
            out_shape=jax.ShapeDtypeStruct((B, cols), out_dtype),
            grid_spec=pltpu.PrefetchScalarGridSpec(
                num_scalar_prefetch=0,
                grid=(grid_b,),
                in_specs=in_specs,
                out_specs=pl.BlockSpec((bt, cols), lambda i: (i, 0)),
            ),
            compiler_params=pltpu.CompilerParams(
                dimension_semantics=("parallel",),
                vmem_limit_bytes=vmem_limit,
            ),
            cost_estimate=pl.CostEstimate(
                flops=int(2 * B * F * O),
                transcendentals=int(trans * B * O),
                bytes_accessed=int(B * F * x_isz + F * O * w_isz
                                   + B * cols * out_isz + (O * 4 if has_bias else 0)),
            ),
        )(*inputs)
        # TODO(synk): batch_norm=True (BatchNorm1d running stats) and
        # training-mode Dropout are not implemented (module defaults are off).
        return out

    # ----------------------------------------------------------------------
    # Standard path: lane-padded output, 2-D (batch, out-feature) grid.
    # ----------------------------------------------------------------------
    O_pad = _round_up(O, _LANE)
    w_p = jnp.pad(w_op, ((0, 0), (0, O_pad - O))) if O_pad != O else w_op

    tn = min(O_pad, _round_up(out_tile, _LANE))
    bt = _round_up(min(batch_tile, max(B, 1)), sublane)
    wbuf = 1 if tn == O_pad else 2   # Buffered(1) only when weight is grid-invariant

    def est(t_b, t_n):
        wb = F * t_n * w_isz + (t_n * 4 if has_bias else 0)
        return 2 * t_b * F * x_isz + 2 * t_b * t_n * out_isz + wbuf * wb

    while bt > sublane and est(bt, tn) > budget:
        bt = max(sublane, _round_up(bt // 2, sublane))
    while tn > _LANE and est(bt, tn) > budget:
        tn = max(_LANE, _round_up(tn // 2, _LANE))

    grid_n = _cdiv(O_pad, tn)
    bt, grid_b = _even_batch_grid(B, bt, sublane)

    w_kwargs = {"pipeline_mode": pl.Buffered(1)} if grid_n == 1 else {}
    in_specs = [
        pl.BlockSpec((bt, F), lambda i, j: (i, 0)),
        pl.BlockSpec((F, tn), lambda i, j: (0, j), **w_kwargs),
    ]
    inputs = [x, w_p]
    if has_bias:
        b_p = b.reshape(1, O).astype(jnp.float32)
        if O_pad != O:
            b_p = jnp.pad(b_p, ((0, 0), (0, O_pad - O)))
        in_specs.append(pl.BlockSpec((1, tn), lambda i, j: (0, j), **w_kwargs))
        inputs.append(b_p)

    est_bytes = est(bt, tn)
    vmem_limit = int(max(est_bytes + (4 << 20),
                         min(budget, est_bytes + (16 << 20))))

    y = pl.pallas_call(
        _make_linear_kernel(act_fn, has_bias, cast_x_to, precision),
        out_shape=jax.ShapeDtypeStruct((B, O_pad), out_dtype),
        grid_spec=pltpu.PrefetchScalarGridSpec(
            num_scalar_prefetch=0,
            grid=(grid_b, grid_n),
            in_specs=in_specs,
            out_specs=pl.BlockSpec((bt, tn), lambda i, j: (i, j)),
        ),
        compiler_params=pltpu.CompilerParams(
            dimension_semantics=("parallel", "parallel"),
            vmem_limit_bytes=vmem_limit,
        ),
        cost_estimate=pl.CostEstimate(
            flops=int(2 * B * F * O_pad),
            transcendentals=int(trans * B * O_pad),
            bytes_accessed=int(B * F * x_isz + F * O_pad * w_isz
                               + B * O_pad * out_isz + (O_pad * 4 if has_bias else 0)),
        ),
    )(*inputs)

    if trim_output and O_pad != O:
        y = y[:, :O]
    # TODO(synk): batch_norm=True (BatchNorm1d running stats) and training-mode
    # Dropout are not implemented (module defaults are off).
    return y


if __name__ == "__main__":
    # LinearBlock(in_channels=32, out_channels=16) — defaults:
    # activation='Tanh', bias=False, batch_norm=False, dropout=None.
    key = jax.random.PRNGKey(0)
    kx, kw, kb = jax.random.split(key, 3)

    B, F, O = 64, 32, 16
    x = jax.random.normal(kx, (B, F), dtype=jnp.float32)
    # Weight stored as (in, out) == torch_weight.T; kaiming-uniform-ish scale.
    w = jax.random.uniform(kw, (F, O), jnp.float32, -1.0, 1.0) / jnp.sqrt(F)
    bvec = jax.random.uniform(kb, (O,), jnp.float32, -1.0, 1.0) / jnp.sqrt(F)

    # 1) Default config (tanh, no bias), f32 compute.
    y = linear_block_forward(x, w)
    jax.block_until_ready(y)
    ref = jnp.tanh(x @ w)
    assert y.shape == (B, O)
    assert jnp.allclose(y, ref, atol=1e-5, rtol=1e-5)

    # 2) Ragged batch (no wrapper padding) + bias + ReLU.
    B2 = 50
    x2 = jax.random.normal(kx, (B2, F), dtype=jnp.float32)
    y2 = linear_block_forward(x2, w, bvec, activation="ReLU")
    jax.block_until_ready(y2)
    ref2 = jnp.maximum(x2 @ w + bvec, 0.0)
    assert y2.shape == (B2, O)
    assert jnp.allclose(y2, ref2, atol=1e-5, rtol=1e-5)

    # 3) skip_connection='concat' fused in-kernel (bias + Sigmoid).
    y3 = linear_block_forward(x, w, bvec, activation="Sigmoid",
                              skip_connection="concat")
    jax.block_until_ready(y3)
    ref3 = jnp.concatenate([x, jax.nn.sigmoid(x @ w + bvec)], axis=1)
    assert y3.shape == (B, F + O)
    assert jnp.allclose(y3, ref3, atol=1e-5, rtol=1e-5)

    # 4) bf16 MXU path: x cast inside the kernel, bias/acc stay f32.
    y4 = linear_block_forward(x, w, compute_dtype=jnp.bfloat16)
    jax.block_until_ready(y4)
    assert jnp.allclose(y4, ref, atol=2e-2, rtol=2e-2)

    print("KERNEL_OK")
</pallas_src>

<mosaic_0001>
module attributes {stable_mosaic.version = 11 : i64} {
  func.func @kernel(%arg0: i32, %arg1: i32, %arg2: memref<64x32xf32, #tpu.memory_space<vmem>>, %arg3: memref<32x128xf32, #tpu.memory_space<vmem>>, %arg4: memref<64x128xf32, #tpu.memory_space<vmem>>) attributes {dimension_semantics = [#tpu.dimension_semantics<parallel>, #tpu.dimension_semantics<parallel>], iteration_bounds = array<i64: 1, 1>, scalar_prefetch = 0 : i64, scratch_operands = 0 : i64, tpu.core_type = #tpu.core_type<tc>, window_params = [{transform_indices = @transform_0, window_bounds = array<i64: 64, 32>}, {pipeline_mode = #tpu.pipeline_mode<synchronous>, transform_indices = @transform_1, window_bounds = array<i64: 32, 128>}, {transform_indices = @transform_2, window_bounds = array<i64: 64, 128>}]} {
    %c0 = arith.constant 0 : index
    %c0_0 = arith.constant 0 : index
    %0 = vector.load %arg2[%c0, %c0_0] : memref<64x32xf32, #tpu.memory_space<vmem>>, vector<64x32xf32>
    %c0_1 = arith.constant 0 : index
    %c0_2 = arith.constant 0 : index
    %1 = vector.load %arg3[%c0_1, %c0_2] : memref<32x128xf32, #tpu.memory_space<vmem>>, vector<32x128xf32>
    %cst = arith.constant dense<0.000000e+00> : vector<64x128xf32>
    %2 = tpu.matmul %0, %1, %cst {dimension_numbers = #tpu.dot_dimension_numbers<[1], [0], [0], [1], [0, 0, 1, 1], [], []>} : vector<64x32xf32>, vector<32x128xf32>, vector<64x128xf32> -> vector<64x128xf32>
    %3 = math.tanh %2 : vector<64x128xf32>
    %c0_3 = arith.constant 0 : index
    %c0_4 = arith.constant 0 : index
    %4 = vector.load %arg4[%c0_3, %c0_4] : memref<64x128xf32, #tpu.memory_space<vmem>>, vector<64x128xf32>
    tpu.vector_store %arg4[%c0_3, %c0_4], %3 {strides = array<i32>} : memref<64x128xf32, #tpu.memory_space<vmem>>, vector<64x128xf32>,
    return
  }
  func.func @transform_0(%arg0: i32, %arg1: i32) -> (i32, i32) {
    %c0_i32 = arith.constant 0 : i32
    %c0_i32_0 = arith.constant 0 : i32
    return %arg0, %c0_i32 : i32, i32
  }
  func.func @transform_1(%arg0: i32, %arg1: i32) -> (i32, i32) {
    %c0_i32 = arith.constant 0 : i32
    %c0_i32_0 = arith.constant 0 : i32
    return %c0_i32, %arg1 : i32, i32
  }
  func.func @transform_2(%arg0: i32, %arg1: i32) -> (i32, i32) {
    %c0_i32 = arith.constant 0 : i32
    return %arg0, %arg1 : i32, i32
  }
}

</mosaic_0001>

<llo_original>
// kernel: tpu_custom_call.1
$region0: #{tpu_custom_call.1}
  #allocation0 [shape = 'u32[]', space=smem, size = 0x4, offset = 0x4, fixed_abs, tag = 'smem constant byte address 0x4 - core index']
  #allocation1 [shape = 'u32[144,128]{1,0:T(1,128)}', space=vmem, size = 0x12000, scoped, tag = 'internal scratch']
  %s0 = inlined_call_operand.vmem [shape: f32[64,32], index: 0, kind: input, shape index: {}]
  %s1 = inlined_call_operand.vmem [shape: f32[32,128], index: 1, kind: input, shape index: {}]
  %s2 = inlined_call_operand.hbm [shape: f32[64,128], index: 2, kind: output, shape index: {}]
  %s3 = sld [smem:[#allocation0]]
  $region18: #{tpu_custom_call.1} parent=0
    _
  %s5 = ssub.s32 1, %s3
  %s6 = scalar_select 0, %s5, %s3
  $region1: #{tpu_custom_call.1} parent=0
    #allocation2 [shape = 'u8[32768]{0}', space=vmem, size = 0x8000, scoped, tag = 'output window, operand 0, single buffered']
    #allocation3 [shape = 's32[1]{0}', space=sflag, size = 0x4, scoped, tag = 'scoped memory for tpu_custom_call.1']
    %7 = vsyncpa [#allocation3], 0
    // Predicated region
    $region2: #{tpu_custom_call.1} parent=1 // pred_check
      _
    $region3: #{tpu_custom_call.1} parent=1 // pred_check_branch
      %9 = sbr.rel (0) target = $region5
    $region4: #{tpu_custom_call.1} parent=1 // pred_region
      _
    $region5: #{tpu_custom_call.1} parent=1 // pred_fallthru
      _
    // Predicated region
    $region6: #{tpu_custom_call.1} parent=1 // pred_check
      _
    $region7: #{tpu_custom_call.1} parent=1 // pred_check_branch
      %11 = sbr.rel (0) target = $region9
    $region8: #{tpu_custom_call.1} parent=1 // pred_region
      _
    $region9: #{tpu_custom_call.1} parent=1 // pred_fallthru
      _
    %v12 = vld [vmem:[%s0] sm:$0xff]
    %v13 = vld [vmem:[%s0 + $0x8] sm:$0xff]
    %v14 = vld [vmem:[%s0 + $0x10] sm:$0xff]
    %v15 = vld [vmem:[%s0 + $0x18] sm:$0xff]
    %v16 = vld [vmem:[%s0 + $0x20] sm:$0xff]
    %v17 = vld [vmem:[%s0 + $0x28] sm:$0xff]
    %v18 = vld [vmem:[%s0 + $0x30] sm:$0xff]
    %v19 = vld [vmem:[%s0 + $0x38] sm:$0xff]
    %v20 = vld [vmem:[%s1] sm:$0xff]
    %v21 = vld [vmem:[%s1 + $0x8] sm:$0xff]
    %v22 = vld [vmem:[%s1 + $0x10] sm:$0xff]
    %v23 = vld [vmem:[%s1 + $0x18] sm:$0xff]
    %vm24 = vcmask 261120
    %v26 = vsel %vm24, %v12, 0
    %v29 = vsel %vm24, %v13, 0
    %v32 = vsel %vm24, %v14, 0
    %v35 = vsel %vm24, %v15, 0
    %v38 = vsel %vm24, %v16, 0
    %v41 = vsel %vm24, %v17, 0
    %v44 = vsel %vm24, %v18, 0
    %v47 = vsel %vm24, %v19, 0
    %49 = vmatprep.subr.mxu0 0.0
    %50 = vmatpush1.msra.mxu0 0.0
    %51 = vmatprep.subr.mxu0 0.0
    %52 = vmatpush1.msra.mxu0 0.0
    %53 = vmatprep.subr.mxu0 0.0
    %54 = vmatpush1.msra.mxu0 0.0
    %55 = vmatprep.subr.mxu0 0.0
    %56 = vmatpush1.msra.mxu0 0.0
    %57 = vmatprep.subr.mxu0 0.0
    %58 = vmatpush1.msra.mxu0 0.0
    %59 = vmatprep.subr.mxu0 0.0
    %60 = vmatpush1.msra.mxu0 0.0
    %61 = vmatprep.subr.mxu0 0.0
    %62 = vmatpush1.msra.mxu0 0.0
    %63 = vmatprep.subr.mxu0 0.0
    %64 = vmatpush1.msra.mxu0 0.0
    %65 = vmatprep.subr.mxu0 0.0
    %66 = vmatpush1.msra.mxu0 0.0
    %67 = vmatprep.subr.mxu0 0.0
    %68 = vmatpush1.msra.mxu0 0.0
    %69 = vmatprep.subr.mxu0 0.0
    %70 = vmatpush1.msra.mxu0 0.0
    %71 = vmatprep.subr.mxu0 0.0
    %72 = vmatpush1.msra.mxu0 0.0
    %73 = vmatprep.subr.mxu0 0.0
    %74 = vmatpush1.msra.mxu0 %v23
    %75 = vmatprep.subr.mxu0 0.0
    %76 = vmatpush1.msra.mxu0 %v22
    %77 = vmatprep.subr.mxu0 0.0
    %78 = vmatpush1.msra.mxu0 %v21
    %79 = vmatprep.subr.mxu0 0.0
    %80 = vmatpush1.msra.mxu0 %v20
    %81 = vmatprep.subr.mxu0 0.0
    %82 = vmatpush2.msra.mxu0 0.0
    %83 = vmatprep.subr.mxu0 0.0
    %84 = vmatpush2.msra.mxu0 0.0
    %85 = vmatprep.subr.mxu0 0.0
    %86 = vmatpush2.msra.mxu0 0.0
    %87 = vmatprep.subr.mxu0 0.0
    %88 = vmatpush2.msra.mxu0 0.0
    %89 = vmatprep.subr.mxu0 0.0
    %90 = vmatpush2.msra.mxu0 0.0
    %91 = vmatprep.subr.mxu0 0.0
    %92 = vmatpush2.msra.mxu0 0.0
    %93 = vmatprep.subr.mxu0 0.0
    %94 = vmatpush2.msra.mxu0 0.0
    %95 = vmatprep.subr.mxu0 0.0
    %96 = vmatpush2.msra.mxu0 0.0
    %97 = vmatprep.subr.mxu0 0.0
    %98 = vmatpush2.msra.mxu0 0.0
    %99 = vmatprep.subr.mxu0 0.0
    %100 = vmatpush2.msra.mxu0 0.0
    %101 = vmatprep.subr.mxu0 0.0
    %102 = vmatpush2.msra.mxu0 0.0
    %103 = vmatprep.subr.mxu0 0.0
    %104 = vmatpush2.msra.mxu0 0.0
    %105 = vmatprep.subr.mxu0 0.0
    %106 = vmatpush2.msra.mxu0 0.0
    %107 = vmatprep.subr.mxu0 0.0
    %108 = vmatpush2.msra.mxu0 0.0
    %109 = vmatprep.subr.mxu0 0.0
    %110 = vmatpush2.msra.mxu0 0.0
    %111 = vmatprep.subr.mxu0 0.0
    %112 = vmatpush2.msra.mxu0 0.0
    %113 = vmatprep.mubr.f32.mxu0 0.0
    %114 = vmatmul.mubr.f32.gmra.mxu0 %v26
    %v115 = vpop.f32.mrf.mxu0
    %v116 = vadd.f32 0.0, %v115
    %v117 = vpop.f32.mrf.mxu0
    %118 = vmatprep.mubr.f32.mxu0 0.0
    %119 = vmatmul.mubr.f32.gmra.mxu0 %v29
    %v120 = vpop.f32.mrf.mxu0
    %v121 = vadd.f32 0.0, %v120
    %v122 = vpop.f32.mrf.mxu0
    %123 = vmatprep.mubr.f32.mxu0 0.0
    %124 = vmatmul.mubr.f32.gmra.mxu0 %v32
    %v125 = vpop.f32.mrf.mxu0
    %v126 = vadd.f32 0.0, %v125
    %v127 = vpop.f32.mrf.mxu0
    %128 = vmatprep.mubr.f32.mxu0 0.0
    %129 = vmatmul.mubr.f32.gmra.mxu0 %v35
    %v130 = vpop.f32.mrf.mxu0
    %v131 = vadd.f32 0.0, %v130
    %v132 = vpop.f32.mrf.mxu0
    %133 = vmatprep.mubr.f32.mxu0 0.0
    %134 = vmatmul.mubr.f32.gmra.mxu0 %v38
    %v135 = vpop.f32.mrf.mxu0
    %v136 = vadd.f32 0.0, %v135
    %v137 = vpop.f32.mrf.mxu0
    %138 = vmatprep.mubr.f32.mxu0 0.0
    %139 = vmatmul.mubr.f32.gmra.mxu0 %v41
    %v140 = vpop.f32.mrf.mxu0
    %v141 = vadd.f32 0.0, %v140
    %v142 = vpop.f32.mrf.mxu0
    %143 = vmatprep.mubr.f32.mxu0 0.0
    %144 = vmatmul.mubr.f32.gmra.mxu0 %v44
    %v145 = vpop.f32.mrf.mxu0
    %v146 = vadd.f32 0.0, %v145
    %v147 = vpop.f32.mrf.mxu0
    %148 = vmatprep.mubr.f32.mxu0 0.0
    %149 = vmatmul.mubr.f32.gmra.mxu0 %v47
    %v150 = vpop.f32.mrf.mxu0
    %v151 = vadd.f32 0.0, %v150
    %v152 = vpop.f32.mrf.mxu0
    %153 = vdwg.mxu0
    %v154 = vtanh.pop %v116
    %v155 = vtanh.pop %v121
    %v156 = vtanh.pop %v126
    %v157 = vtanh.pop %v131
    %v158 = vtanh.pop %v136
    %v159 = vtanh.pop %v141
    %v160 = vtanh.pop %v146
    %v161 = vtanh.pop %v151
    %162 = vst [vmem:[#allocation2] sm:$0xff] %v154
    %163 = vst [vmem:[#allocation2 + $0x8] sm:$0xff] %v155
    %164 = vst [vmem:[#allocation2 + $0x10] sm:$0xff] %v156
    %165 = vst [vmem:[#allocation2 + $0x18] sm:$0xff] %v157
    %166 = vst [vmem:[#allocation2 + $0x20] sm:$0xff] %v158
    %167 = vst [vmem:[#allocation2 + $0x28] sm:$0xff] %v159
    %168 = vst [vmem:[#allocation2 + $0x30] sm:$0xff] %v160
    %169 = vst [vmem:[#allocation2 + $0x38] sm:$0xff] %v161
    // Predicated region
    $region10: #{tpu_custom_call.1} parent=1 // pred_check
      _
    $region11: #{tpu_custom_call.1} parent=1 // pred_check_branch
      %171 = sbr.rel (0) target = $region13
    $region12: #{tpu_custom_call.1} parent=1 // pred_region
      %s173 = ssub.s32 1024, 1024
      %174 = vsyncadd [#allocation3], %s173
      %s175 = sshll.u32 [#allocation2], 4
      %s176 = int_to_ptr.vmem [resolvable:$true] %s175
      %181 = dma.vmem_to_hbm [thread:$0]  %s176, 1024, %s2, [#allocation3], 128, 128, 8
    $region13: #{tpu_custom_call.1} parent=1 // pred_fallthru
      _
    // Predicated region
    $region14: #{tpu_custom_call.1} parent=1 // pred_check
      _
    $region15: #{tpu_custom_call.1} parent=1 // pred_check_branch
      %183 = sbr.rel (0) target = $region17
    $region16: #{tpu_custom_call.1} parent=1 // pred_region
      %184 = dma.done [#allocation3], 1024
    $region17: #{tpu_custom_call.1} parent=1 // pred_fallthru
      _
    %185 = vsyncpa [#allocation3], 1

</llo_original>
